<compile_context>
chip_gen: v5e
topology: v5e:2x2
jax: 0.10.0
libtpu: 0.0.40
codegen_flags: <defaults>
</compile_context>

<pallas_src>
import jax
import jax.numpy as jnp
from jax.experimental import pallas as pl
from jax.experimental.pallas import tpu as pltpu


# ---------------------------------------------------------------------------
# Problem sizes (small, consistent with the module's __init__ shapes)
# ---------------------------------------------------------------------------
NUM_GRAPHS = 8        # len(batch_graph)
DENSE_DIM  = 64       # self.dgcnn.dense_dim  (stand-in)
HIDDEN     = 32       # args.hidden
NUM_CLASS  = 4        # args.num_class
OUT_LANES  = 128      # lane-dense merged output width


# ---------------------------------------------------------------------------
# Parameter packing: one f32 slab, DMA'd as a single descriptor.
#   rows 0:D        = W1            (D, H)
#   rows D:D+H      = W2 (lanes 0:C)(H, C)
#   row  D+H        = b1            (H,)
#   row  D+H+1      = b2 (lanes 0:C)(C,)
# Do this ONCE per parameter set (outside the per-step call).
# ---------------------------------------------------------------------------
def pack_params(w1, b1, w2, b2):
    d, h = w1.shape
    c = w2.shape[1]
    slab = jnp.zeros((d + h + 2, h), jnp.float32)
    slab = slab.at[:d, :].set(w1.astype(jnp.float32))
    slab = slab.at[d:d + h, :c].set(w2.astype(jnp.float32))
    slab = slab.at[d + h, :].set(b1.astype(jnp.float32))
    slab = slab.at[d + h + 1, :c].set(b2.astype(jnp.float32))
    return slab


# ---------------------------------------------------------------------------
# Fused MLPClassifier:
#   h1      = relu(x @ W1 + b1)
#   logits  = h1 @ W2 + b2
#   logp    = log_softmax(logits, axis=1)
#   loss    = nll_loss(logp, y)   (mean reduction)
#   acc     = mean(argmax(logp, 1) == y)
# Single-block kernel (block_shape == full array shape for every operand).
# ---------------------------------------------------------------------------
def mlp_classifier(embed, labels, packed_params, *, hidden=HIDDEN,
                   num_class=NUM_CLASS):
    n, d = embed.shape
    h = hidden
    c = num_class
    assert packed_params.shape == (d + h + 2, h)

    # Fold int32 labels (bit-exact) into column D of the embed tile: the
    # (N,1) int32 array would pad to a full (8,128) VMEM tile anyway, so a
    # separate input costs a whole DMA descriptor for 32 bytes.
    labels_bits = jax.lax.bitcast_convert_type(
        labels.astype(jnp.int32).reshape(n, 1), jnp.float32)        # (N, 1) f32
    x_aug = jnp.concatenate([embed.astype(jnp.float32), labels_bits], axis=1)

    def kernel(xaug_ref, p_ref, out_ref):
        inv_n = jnp.float32(1.0 / n)                                # compile-time const

        x = xaug_ref[:, :d]                                         # [N, D] f32
        labels_i = pltpu.bitcast(xaug_ref[:, d:d + 1], jnp.int32)   # [N, 1] i32

        # Parameter slab slices (W1/W2 start on sublane-tile boundaries).
        w1 = p_ref[:d, :]                                           # [D, H]
        w2 = p_ref[d:d + h, :c]                                     # [H, C]
        b1 = p_ref[d + h:d + h + 1, :]                              # [1, H]
        b2 = p_ref[d + h + 1:d + h + 2, :c]                         # [1, C]

        # Linear 1 + ReLU (MXU matmul, f32 accumulate)
        h1 = jnp.dot(x, w1, preferred_element_type=jnp.float32) + b1
        h1 = jnp.maximum(h1, 0.0)                                   # [N, H]

        # Linear 2 (tiny C stays on the MXU; off the critical slot here)
        logits = jnp.dot(h1, w2, preferred_element_type=jnp.float32) + b2

        # log_softmax along the class axis
        m = jnp.max(logits, axis=-1, keepdims=True)                 # [N, 1]
        lse = m + jnp.log(jnp.sum(jnp.exp(logits - m), axis=-1, keepdims=True))
        logp = logits - lse                                         # [N, C]

        # NLL mean: loss = mean(lse_i - logits[i, y_i])
        col = jax.lax.broadcasted_iota(jnp.int32, logits.shape, 1)  # [N, C]
        label_mask = col == labels_i                                # [N, C] bool
        picked = jnp.sum(jnp.where(label_mask, logits, 0.0))
        loss = (jnp.sum(lse) - picked) * inv_n

        # accuracy: first-max argmax (matches torch.max tie behaviour) vs label
        is_max = logits == m
        pred = jnp.min(jnp.where(is_max, col, c), axis=-1, keepdims=True)
        acc = jnp.sum((pred == labels_i).astype(jnp.float32)) * inv_n

        # Single lane-dense (N, 128) output: lanes 0:C hold logp; loss/acc live
        # at row 0, lanes C and C+1; remaining lanes are zero.  One unmasked
        # full-tile store, one output DMA.
        row_id = jax.lax.broadcasted_iota(jnp.int32, (n, OUT_LANES - c), 0)
        lane_id = jax.lax.broadcasted_iota(jnp.int32, (n, OUT_LANES - c), 1)
        sel_loss = ((row_id == 0) & (lane_id == 0)).astype(jnp.float32)
        sel_acc = ((row_id == 0) & (lane_id == 1)).astype(jnp.float32)
        extras = sel_loss * loss + sel_acc * acc                    # [N, 128-C]
        out_ref[...] = jnp.concatenate([logp, extras], axis=1)      # [N, 128]

    full = lambda shape: pl.BlockSpec(shape, lambda: (0,) * len(shape))

    bytes_accessed = 4 * (n * (d + 1) + packed_params.size + n * OUT_LANES)
    cost = pl.CostEstimate(
        flops=2 * n * (d * h + h * c),
        transcendentals=n * c + n,            # exp per class + log per row
        bytes_accessed=bytes_accessed,
    )

    out = pl.pallas_call(
        kernel,
        out_shape=jax.ShapeDtypeStruct((n, OUT_LANES), jnp.float32),
        in_specs=[
            full((n, d + 1)),                 # embed | bitcast(labels)
            full(packed_params.shape),        # W1|W2|b1|b2 slab
        ],
        out_specs=full((n, OUT_LANES)),
        cost_estimate=cost,
    )(x_aug, packed_params)

    logp_out = out[:, :c]
    loss_out = out[0, c]
    acc_out = out[0, c + 1]
    return logp_out, loss_out, acc_out


# ---------------------------------------------------------------------------
# Classifier.forward equivalent.
# ---------------------------------------------------------------------------
def classifier_forward(graph_embeddings, labels, packed_params):
    # TODO(synk): dgcnn (Model) is not defined in the provided code; its output
    # embeddings are supplied directly as `graph_embeddings`.
    # The original split-then-concatenate re-assembles the SAME arrays in the
    # SAME order, so it is elided here (avoids a redundant HBM copy).
    return mlp_classifier(graph_embeddings, labels, packed_params)


def init_params(key):
    """Deterministic nn.Linear-style init: U(-1/sqrt(fan_in), 1/sqrt(fan_in))."""
    k1, k2, k3, k4 = jax.random.split(key, 4)
    lim1 = 1.0 / jnp.sqrt(jnp.float32(DENSE_DIM))
    lim2 = 1.0 / jnp.sqrt(jnp.float32(HIDDEN))
    w1 = jax.random.uniform(k1, (DENSE_DIM, HIDDEN), jnp.float32, -lim1, lim1)
    b1 = jax.random.uniform(k2, (HIDDEN,), jnp.float32, -lim1, lim1)
    w2 = jax.random.uniform(k3, (HIDDEN, NUM_CLASS), jnp.float32, -lim2, lim2)
    b2 = jax.random.uniform(k4, (NUM_CLASS,), jnp.float32, -lim2, lim2)
    return (w1, b1, w2, b2)


if __name__ == "__main__":
    key = jax.random.PRNGKey(0)
    k_embed, k_labels, k_params = jax.random.split(key, 3)

    # Stand-in for dgcnn(batch_graph, node_feat) outputs on the full batch.
    graph_embeddings = jax.random.normal(k_embed, (NUM_GRAPHS, DENSE_DIM), jnp.float32)
    labels = jax.random.randint(k_labels, (NUM_GRAPHS,), 0, NUM_CLASS, jnp.int32)
    w1, b1, w2, b2 = init_params(k_params)
    packed_params = pack_params(w1, b1, w2, b2)   # pack once, reuse every step

    logp, loss, acc = classifier_forward(graph_embeddings, labels, packed_params)
    jax.block_until_ready((logp, loss, acc))

    # Lightweight sanity check against pure-JAX reference.
    h1 = jnp.maximum(graph_embeddings @ w1 + b1, 0.0)
    ref_logp = jax.nn.log_softmax(h1 @ w2 + b2, axis=-1)
    assert jnp.allclose(logp, ref_logp, atol=1e-5), "log_softmax mismatch"
    ref_loss = -jnp.mean(ref_logp[jnp.arange(NUM_GRAPHS), labels])
    assert jnp.allclose(loss, ref_loss, atol=1e-5), "loss mismatch"
    ref_acc = jnp.mean((jnp.argmax(ref_logp, axis=-1) == labels).astype(jnp.float32))
    assert jnp.allclose(acc, ref_acc, atol=1e-6), "accuracy mismatch"

    print("KERNEL_OK")
</pallas_src>

<mosaic_0001>
module attributes {stable_mosaic.version = 11 : i64} {
  func.func @kernel(%arg0: memref<8x65xf32, #tpu.memory_space<vmem>>, %arg1: memref<98x32xf32, #tpu.memory_space<vmem>>, %arg2: memref<8x128xf32, #tpu.memory_space<vmem>>) attributes {dimension_semantics = [], scalar_prefetch = 0 : i64, scratch_operands = 0 : i64, tpu.core_type = #tpu.core_type<tc>} {
    %c0 = arith.constant 0 : index
    %c0_0 = arith.constant 0 : index
    %0 = vector.load %arg0[%c0, %c0_0] : memref<8x65xf32, #tpu.memory_space<vmem>>, vector<8x64xf32>
    %c0_1 = arith.constant 0 : index
    %c64 = arith.constant 64 : index
    %1 = vector.load %arg0[%c0_1, %c64] : memref<8x65xf32, #tpu.memory_space<vmem>>, vector<8x1xf32>
    %2 = tpu.bitcast %1 : vector<8x1xf32> -> vector<8x1xi32>
    %c0_2 = arith.constant 0 : index
    %c0_3 = arith.constant 0 : index
    %3 = vector.load %arg1[%c0_2, %c0_3] : memref<98x32xf32, #tpu.memory_space<vmem>>, vector<64x32xf32>
    %c64_4 = arith.constant 64 : index
    %c0_5 = arith.constant 0 : index
    %4 = vector.load %arg1[%c64_4, %c0_5] : memref<98x32xf32, #tpu.memory_space<vmem>>, vector<32x4xf32>
    %c96 = arith.constant 96 : index
    %c0_6 = arith.constant 0 : index
    %5 = vector.load %arg1[%c96, %c0_6] : memref<98x32xf32, #tpu.memory_space<vmem>>, vector<1x32xf32>
    %c97 = arith.constant 97 : index
    %c0_7 = arith.constant 0 : index
    %6 = vector.load %arg1[%c97, %c0_7] : memref<98x32xf32, #tpu.memory_space<vmem>>, vector<1x4xf32>
    %cst = arith.constant dense<0.000000e+00> : vector<8x32xf32>
    %7 = tpu.matmul %0, %3, %cst {dimension_numbers = #tpu.dot_dimension_numbers<[1], [0], [0], [1], [0, 0, 1, 1], [], []>} : vector<8x64xf32>, vector<64x32xf32>, vector<8x32xf32> -> vector<8x32xf32>
    %8 = vector.broadcast %5 : vector<1x32xf32> to vector<8x32xf32>
    %9 = arith.addf %7, %8 : vector<8x32xf32>
    %cst_8 = arith.constant 0.000000e+00 : f32
    %10 = vector.broadcast %cst_8 : f32 to vector<8x32xf32>
    %11 = arith.maximumf %9, %10 : vector<8x32xf32>
    %cst_9 = arith.constant dense<0.000000e+00> : vector<8x4xf32>
    %12 = tpu.matmul %11, %4, %cst_9 {dimension_numbers = #tpu.dot_dimension_numbers<[1], [0], [0], [1], [0, 0, 1, 1], [], []>} : vector<8x32xf32>, vector<32x4xf32>, vector<8x4xf32> -> vector<8x4xf32>
    %13 = vector.broadcast %6 : vector<1x4xf32> to vector<8x4xf32>
    %14 = arith.addf %12, %13 : vector<8x4xf32>
    %cst_10 = arith.constant dense<0xFF800000> : vector<8xf32>
    %15 = vector.multi_reduction <maximumf>, %14, %cst_10 [1] : vector<8x4xf32> to vector<8xf32>
    %16 = vector.shape_cast %15 : vector<8xf32> to vector<8x1xf32>
    %17 = vector.broadcast %16 : vector<8x1xf32> to vector<8x4xf32>
    %18 = arith.subf %14, %17 : vector<8x4xf32>
    %19 = math.exp %18 : vector<8x4xf32>
    %cst_11 = arith.constant dense<0.000000e+00> : vector<8xf32>
    %20 = vector.multi_reduction <add>, %19, %cst_11 [1] : vector<8x4xf32> to vector<8xf32>
    %21 = vector.shape_cast %20 : vector<8xf32> to vector<8x1xf32>
    %22 = math.log %21 : vector<8x1xf32>
    %23 = arith.addf %16, %22 : vector<8x1xf32>
    %24 = vector.broadcast %23 : vector<8x1xf32> to vector<8x4xf32>
    %25 = arith.subf %14, %24 : vector<8x4xf32>
    %26 = tpu.iota {dimensions = array<i32: 1>} : vector<8x4xi32>
    %27 = vector.broadcast %2 : vector<8x1xi32> to vector<8x4xi32>
    %28 = arith.cmpi eq, %26, %27 : vector<8x4xi32>
    %cst_12 = arith.constant 0.000000e+00 : f32
    %29 = vector.broadcast %cst_12 : f32 to vector<8x4xf32>
    %30 = arith.select %28, %14, %29 : vector<8x4xi1>, vector<8x4xf32>
    %31 = vector.shape_cast %30 : vector<8x4xf32> to vector<1x8x4xf32>
    %cst_13 = arith.constant dense<0.000000e+00> : vector<1xf32>
    %32 = vector.multi_reduction <add>, %31, %cst_13 [1, 2] : vector<1x8x4xf32> to vector<1xf32>
    %33 = vector.shape_cast %32 : vector<1xf32> to vector<1x1x1xf32>
    %34 = vector.extract %33[0, 0, 0] : f32 from vector<1x1x1xf32>
    %35 = vector.shape_cast %23 : vector<8x1xf32> to vector<1x8x1xf32>
    %cst_14 = arith.constant dense<0.000000e+00> : vector<1xf32>
    %36 = vector.multi_reduction <add>, %35, %cst_14 [1, 2] : vector<1x8x1xf32> to vector<1xf32>
    %37 = vector.shape_cast %36 : vector<1xf32> to vector<1x1x1xf32>
    %38 = vector.extract %37[0, 0, 0] : f32 from vector<1x1x1xf32>
    %39 = arith.subf %38, %34 : f32
    %cst_15 = arith.constant 1.250000e-01 : f32
    %40 = arith.mulf %39, %cst_15 : f32
    %41 = vector.broadcast %16 : vector<8x1xf32> to vector<8x4xf32>
    %42 = arith.cmpf oeq, %14, %41 : vector<8x4xf32>
    %c4_i32 = arith.constant 4 : i32
    %43 = vector.broadcast %c4_i32 : i32 to vector<8x4xi32>
    %44 = arith.select %42, %26, %43 : vector<8x4xi1>, vector<8x4xi32>
    %cst_16 = arith.constant dense<2147483647> : vector<8xi32>
    %45 = vector.multi_reduction <minsi>, %44, %cst_16 [1] : vector<8x4xi32> to vector<8xi32>
    %46 = vector.shape_cast %45 : vector<8xi32> to vector<8x1xi32>
    %47 = arith.cmpi eq, %46, %2 : vector<8x1xi32>
    %48 = arith.extui %47 : vector<8x1xi1> to vector<8x1xi32>
    %49 = arith.sitofp %48 : vector<8x1xi32> to vector<8x1xf32>
    %50 = vector.shape_cast %49 : vector<8x1xf32> to vector<1x8x1xf32>
    %cst_17 = arith.constant dense<0.000000e+00> : vector<1xf32>
    %51 = vector.multi_reduction <add>, %50, %cst_17 [1, 2] : vector<1x8x1xf32> to vector<1xf32>
    %52 = vector.shape_cast %51 : vector<1xf32> to vector<1x1x1xf32>
    %53 = vector.extract %52[0, 0, 0] : f32 from vector<1x1x1xf32>
    %cst_18 = arith.constant 1.250000e-01 : f32
    %54 = arith.mulf %53, %cst_18 : f32
    %55 = tpu.iota {dimensions = array<i32: 0>} : vector<8x124xi32>
    %56 = tpu.iota {dimensions = array<i32: 1>} : vector<8x124xi32>
    %c0_i32 = arith.constant 0 : i32
    %57 = vector.broadcast %c0_i32 : i32 to vector<8x124xi32>
    %58 = arith.cmpi eq, %55, %57 : vector<8x124xi32>
    %c0_i32_19 = arith.constant 0 : i32
    %59 = vector.broadcast %c0_i32_19 : i32 to vector<8x124xi32>
    %60 = arith.cmpi eq, %56, %59 : vector<8x124xi32>
    %61 = arith.andi %58, %60 : vector<8x124xi1>
    %62 = arith.extui %61 : vector<8x124xi1> to vector<8x124xi32>
    %63 = arith.sitofp %62 : vector<8x124xi32> to vector<8x124xf32>
    %c0_i32_20 = arith.constant 0 : i32
    %64 = vector.broadcast %c0_i32_20 : i32 to vector<8x124xi32>
    %65 = arith.cmpi eq, %55, %64 : vector<8x124xi32>
    %c1_i32 = arith.constant 1 : i32
    %66 = vector.broadcast %c1_i32 : i32 to vector<8x124xi32>
    %67 = arith.cmpi eq, %56, %66 : vector<8x124xi32>
    %68 = arith.andi %65, %67 : vector<8x124xi1>
    %69 = arith.extui %68 : vector<8x124xi1> to vector<8x124xi32>
    %70 = arith.sitofp %69 : vector<8x124xi32> to vector<8x124xf32>
    %71 = vector.broadcast %40 : f32 to vector<8x124xf32>
    %72 = arith.mulf %63, %71 : vector<8x124xf32>
    %73 = vector.broadcast %54 : f32 to vector<8x124xf32>
    %74 = arith.mulf %70, %73 : vector<8x124xf32>
    %75 = arith.addf %72, %74 : vector<8x124xf32>
    %76 = tpu.concatenate %25, %75 in 1 : vector<8x4xf32>, vector<8x124xf32> -> vector<8x128xf32>
    %c0_21 = arith.constant 0 : index
    %c0_22 = arith.constant 0 : index
    %77 = vector.load %arg2[%c0_21, %c0_22] : memref<8x128xf32, #tpu.memory_space<vmem>>, vector<8x128xf32>
    tpu.vector_store %arg2[%c0_21, %c0_22], %76 {strides = array<i32>} : memref<8x128xf32, #tpu.memory_space<vmem>>, vector<8x128xf32>,
    return
  }
}

</mosaic_0001>

<llo_original>
// kernel: tpu_custom_call.1
$region0: #{tpu_custom_call.1}
  #allocation0 [shape = 'u32[]', space=smem, size = 0x4, offset = 0x4, fixed_abs, tag = 'smem constant byte address 0x4 - core index']
  #allocation1 [shape = 'u32[72,128]{1,0:T(1,128)}', space=vmem, size = 0x9000, scoped, tag = 'internal scratch']
  %s0 = inlined_call_operand.vmem [shape: f32[8,65], index: 0, kind: input, shape index: {}]
  %s1 = inlined_call_operand.vmem [shape: f32[98,32], index: 1, kind: input, shape index: {}]
  %s2 = inlined_call_operand.hbm [shape: f32[8,128], index: 2, kind: output, shape index: {}]
  %s3 = sld [smem:[#allocation0]]
  $region18: #{tpu_custom_call.1} parent=0
    _
  %s5 = ssub.s32 1, %s3
  %s6 = scalar_select 0, %s5, %s3
  $region1: #{tpu_custom_call.1} parent=0
    #allocation2 [shape = 'u8[4096]{0}', space=vmem, size = 0x1000, scoped, tag = 'output window, operand 0, single buffered']
    #allocation3 [shape = 's32[1]{0}', space=sflag, size = 0x4, scoped, tag = 'scoped memory for tpu_custom_call.1']
    %7 = vsyncpa [#allocation3], 0
    // Predicated region
    $region2: #{tpu_custom_call.1} parent=1 // pred_check
      _
    $region3: #{tpu_custom_call.1} parent=1 // pred_check_branch
      %9 = sbr.rel (0) target = $region5
    $region4: #{tpu_custom_call.1} parent=1 // pred_region
      _
    $region5: #{tpu_custom_call.1} parent=1 // pred_fallthru
      _
    // Predicated region
    $region6: #{tpu_custom_call.1} parent=1 // pred_check
      _
    $region7: #{tpu_custom_call.1} parent=1 // pred_check_branch
      %11 = sbr.rel (0) target = $region9
    $region8: #{tpu_custom_call.1} parent=1 // pred_region
      _
    $region9: #{tpu_custom_call.1} parent=1 // pred_fallthru
      _
    %v12 = vld [vmem:[%s0] sm:$0xff]
    %v14 = vld [vmem:[%s1] sm:$0xff]
    %v15 = vld [vmem:[%s1 + $0x8] sm:$0xff]
    %v16 = vld [vmem:[%s1 + $0x10] sm:$0xff]
    %v17 = vld [vmem:[%s1 + $0x18] sm:$0xff]
    %v18 = vld [vmem:[%s1 + $0x20] sm:$0xff]
    %v19 = vld [vmem:[%s1 + $0x28] sm:$0xff]
    %v20 = vld [vmem:[%s1 + $0x30] sm:$0xff]
    %v21 = vld [vmem:[%s1 + $0x38] sm:$0xff]
    %v22 = vld [vmem:[%s1 + $0x40] sm:$0xff]
    %v23 = vld [vmem:[%s1 + $0x48] sm:$0xff]
    %v24 = vld [vmem:[%s1 + $0x50] sm:$0xff]
    %v25 = vld [vmem:[%s1 + $0x58] sm:$0xff]
    %v26 = vld [vmem:[%s1 + $0x60] sm:$0x1]
    %v27 = vld [vmem:[%s1 + $0x61] sm:$0x1]
    %v28 = vperm.slane %v26, 0
    %vm29 = vcmask 523264
    %v30 = vsel %vm29, %v12, 0
    %32 = vmatpush.msra.mxu0 0.0
    %33 = vmatpush.msra.mxu0 0.0
    %34 = vmatpush.msra.mxu0 0.0
    %35 = vmatpush.msra.mxu0 0.0
    %36 = vmatpush.msra.mxu0 0.0
    %37 = vmatpush.msra.mxu0 0.0
    %38 = vmatpush.msra.mxu0 0.0
    %39 = vmatpush.msra.mxu0 0.0
    %40 = vmatpush.msra.mxu0 %v21
    %41 = vmatpush.msra.mxu0 %v20
    %42 = vmatpush.msra.mxu0 %v19
    %43 = vmatpush.msra.mxu0 %v18
    %44 = vmatpush.msra.mxu0 %v17
    %45 = vmatpush.msra.mxu0 %v16
    %46 = vmatpush.msra.mxu0 %v15
    %47 = vmatpush.msra.mxu0 %v14
    %48 = vmatmul.f32.gmra.mxu0 %v30
    %v49 = vpop.f32.mrf.mxu0
    %v50 = vadd.f32 %v28, %v49
    %51 = vdwg.mxu0
    %v52 = vmax.f32 %v50, 0.0
    %v53 = vperm.slane %v27, 0
    %vm54 = vcmask 261120
    %v56 = vsel %vm54, %v52, 0
    %58 = vmatpush.msra.mxu0 0.0
    %59 = vmatpush.msra.mxu0 0.0
    %60 = vmatpush.msra.mxu0 0.0
    %61 = vmatpush.msra.mxu0 0.0
    %62 = vmatpush.msra.mxu0 0.0
    %63 = vmatpush.msra.mxu0 0.0
    %64 = vmatpush.msra.mxu0 0.0
    %65 = vmatpush.msra.mxu0 0.0
    %66 = vmatpush.msra.mxu0 0.0
    %67 = vmatpush.msra.mxu0 0.0
    %68 = vmatpush.msra.mxu0 0.0
    %69 = vmatpush.msra.mxu0 0.0
    %70 = vmatpush.msra.mxu0 %v25
    %71 = vmatpush.msra.mxu0 %v24
    %72 = vmatpush.msra.mxu0 %v23
    %73 = vmatpush.msra.mxu0 %v22
    %74 = vmatmul.f32.gmra.mxu0 %v56
    %v75 = vpop.f32.mrf.mxu0
    %v76 = vadd.f32 %v53, %v75
    %77 = vdwg.mxu0
    %vm78 = vcmask 31744
    %v79 = vsel %vm78, %v76, -inf
    %80 = vmax.xlane.f32.xlu0 %v79
    %v81 = vpop.xlane.xlu0 %80
    %v82 = vsub.f32 %v76, %v81
    %v83 = vmul.f32 %v82, 1.442695
    %v84 = vpow.pop %v83
    %v85 = vsel %vm78, %v84, 0.0
    %86 = vadd.xlane.f32.xlu0 %v85
    %v87 = vpop.xlane.xlu0 %86
    %v88 = vlog2.pop %v87
    %v89 = vmul.f32 %v88, 0.6931472
    %v90 = vadd.f32 %v81, %v89
    %v91 = vsub.f32 %v76, %v90
    %v92 = vlaneseq
    %v93 = vand.u32 %v92, 127
    %94 = vset.pattern.permute.xlu0 64
    %95 = vperm.xlu0 %94, %v12
    %v96 = vpop.permute.xlu0 %95
    %vm97 = vcmp.eq.s32.totalorder %v93, %v96
    %v98 = vsel %vm97, %v76, 0.0
    %v99 = vsel %vm78, %v98, 0.0
    %100 = vadd.xlane.f32.xlu0 %v99
    %v101 = vpop.xlane.xlu0 %100
    %v102 = vrot.slane %v101, 4
    %v103 = vadd.f32 %v101, %v102
    %v104 = vrot.slane %v103, 2
    %v105 = vadd.f32 %v103, %v104
    %v106 = vrot.slane %v105, 1
    %v107 = vadd.f32 %v105, %v106
    %s108 = vtos %v107
    %vm109 = vcmask 7168
    %v110 = vsel %vm109, %v90, 0.0
    %111 = vadd.xlane.f32.xlu0 %v110
    %v112 = vpop.xlane.xlu0 %111
    %v113 = vrot.slane %v112, 4
    %v114 = vadd.f32 %v112, %v113
    %v115 = vrot.slane %v114, 2
    %v116 = vadd.f32 %v114, %v115
    %v117 = vrot.slane %v116, 1
    %v118 = vadd.f32 %v116, %v117
    %s119 = vtos %v118
    %s120 = ssub.f32 %s119, %s108
    %s121 = smul.f32 %s120, 0.125
    %vm122 = vcmp.eq.f32.partialorder %v76, %v81
    %v123 = vsel %vm122, %v93, 4
    %v124 = vsel %vm78, %v123, 2147483647
    %v125 = vand.u32 %v124, 65535
    %v126 = vshra.s32 %v124, 16
    %v127 = vcvt.s32.f32 %v125
    %v128 = vcvt.s32.f32 %v126
    %129 = vmin.xlane.f32.xlu0 %v128
    %v130 = vpop.xlane.xlu0 %129
    %vm131 = vcmp.eq.f32.partialorder %v128, %v130
    %v132 = vsel %vm131, %v127, inf
    %133 = vmin.xlane.f32.xlu0 %v132
    %v134 = vpop.xlane.xlu0 %133
    %v135 = vcvt.f32.s32 %v134
    %v136 = vcvt.f32.s32 %v130
    %v137 = vshll.u32 %v136, 16
    %v138 = vadd.s32 %v137, %v135
    %vm139 = vcmp.eq.s32.totalorder %v138, %v12
    %v140 = vsel %vm139, 1, 0
    %v141 = vcvt.s32.f32 %v140
    %143 = vrot.lane.b32.xlu0 %v141, 64
    %v144 = vpop.permute.xlu0 %143
    %v146 = vsel %vm109, %v144, 0.0
    %147 = vadd.xlane.f32.xlu0 %v146
    %v148 = vpop.xlane.xlu0 %147
    %v149 = vrot.slane %v148, 4
    %v150 = vadd.f32 %v148, %v149
    %v151 = vrot.slane %v150, 2
    %v152 = vadd.f32 %v150, %v151
    %v153 = vrot.slane %v152, 1
    %v154 = vadd.f32 %v152, %v153
    %s155 = vtos %v154
    %s156 = smul.f32 %s155, 0.125
    %v157 = vlaneseq
    %v158 = vshrl.u32 %v157, 7
    %vm159 = vcmp.eq.s32.totalorder %v158, 0
    %vm160 = vcmp.eq.s32.totalorder %v93, 0
    %vm161 = vmand %vm159, %vm160
    %v162 = vsel %vm161, 1, 0
    %v163 = vcvt.s32.f32 %v162
    %vm164 = vcmp.eq.s32.totalorder %v93, 1
    %vm165 = vmand %vm159, %vm164
    %v166 = vsel %vm165, 1, 0
    %v167 = vcvt.s32.f32 %v166
    %v168 = vstv %s121
    %v169 = vmul.f32 %v163, %v168
    %v170 = vstv %s156
    %v171 = vmul.f32 %v167, %v170
    %v172 = vadd.f32 %v169, %v171
    %174 = vrot.lane.b32.xlu0 %v172, 4
    %v175 = vpop.permute.xlu0 %174
    %v177 = vsel %vm78, %v91, %v175
    %178 = vst [vmem:[#allocation2] sm:$0xff] %v177
    // Predicated region
    $region10: #{tpu_custom_call.1} parent=1 // pred_check
      _
    $region11: #{tpu_custom_call.1} parent=1 // pred_check_branch
      %180 = sbr.rel (0) target = $region13
    $region12: #{tpu_custom_call.1} parent=1 // pred_region
      %182 = vsyncadd [#allocation3], 0
      %s184 = sshll.u32 [#allocation2], 4
      %s185 = int_to_ptr.vmem [resolvable:$true] %s184
      %s186 = sshll.u32 %s2, 4
      %s187 = int_to_ptr.hbm [resolvable:$true] %s186
      %189 = dma.vmem_to_hbm [thread:$0]  %s185, 128, %s187, [#allocation3]
    $region13: #{tpu_custom_call.1} parent=1 // pred_fallthru
      _
    // Predicated region
    $region14: #{tpu_custom_call.1} parent=1 // pred_check
      _
    $region15: #{tpu_custom_call.1} parent=1 // pred_check_branch
      %191 = sbr.rel (0) target = $region17
    $region16: #{tpu_custom_call.1} parent=1 // pred_region
      %193 = dma.done [#allocation3], 128
    $region17: #{tpu_custom_call.1} parent=1 // pred_fallthru
      _
    %194 = vsyncpa [#allocation3], 1

</llo_original>
